<compile_context>
chip_gen: v7x
topology: tpu7x:2x2x1
jax: 0.10.0
libtpu: 0.0.40
codegen_flags: <defaults>
</compile_context>

<pallas_src>
import functools

import jax
import jax.numpy as jnp
from jax.experimental import pallas as pl
from jax.experimental.pallas import tpu as pltpu


def _weighted_mse_kernel(inp_ref, tgt_ref, w_ref, out_ref, acc_ref, *,
                         total_rows, total_cols, tile_rows, tile_cols,
                         need_row_mask, need_col_mask):
    i = pl.program_id(0)          # row-block axis ("parallel")
    j = pl.program_id(1)          # column-block / reduction axis ("arbitrary")

    @pl.when(j == 0)
    def _init():
        acc_ref[0, 0] = jnp.float32(0.0)

    # Up-cast to f32 inside the kernel (inputs arrive in their native dtype,
    # halving HBM traffic for bf16 inputs).
    diff = inp_ref[...].astype(jnp.float32) - tgt_ref[...].astype(jnp.float32)
    w = w_ref[...].astype(jnp.float32)           # (tm, 1), lane-broadcast
    contrib = (diff * diff) * w                  # (tm, tn)

    if need_row_mask or need_col_mask:
        valid = None
        if need_row_mask:
            row_ids = i * tile_rows + jax.lax.broadcasted_iota(
                jnp.int32, contrib.shape, 0)
            valid = row_ids < total_rows
        if need_col_mask:
            col_ids = j * tile_cols + jax.lax.broadcasted_iota(
                jnp.int32, contrib.shape, 1)
            cvalid = col_ids < total_cols
            valid = cvalid if valid is None else (valid & cvalid)
        # NOTE: select (not multiply) so NaN/Inf garbage in padded rows/lanes
        # never propagates into the sum.
        contrib = jnp.where(valid, contrib, 0.0)

    acc_ref[0, 0] += jnp.sum(contrib)

    @pl.when(j == pl.num_programs(1) - 1)
    def _finalize():
        # Lane-dense (8,128) write of this row block's partial sum; only
        # element [0,0] is consumed by the wrapper.
        out_ref[...] = jnp.full(out_ref.shape, acc_ref[0, 0], dtype=jnp.float32)


def _choose_tiles(B, D, in_itemsize, budget, sublane):
    """Pick (tile_rows, tile_cols) from a VMEM byte budget (lane-pad aware)."""
    lane = 128

    def lane_pad(n):
        return ((n + lane - 1) // lane) * lane

    # Bytes per row of tile: input+target (2 arrays x 2 pipeline buffers,
    # lane-padded) + weight column (2 buffers, 128 lanes, f32).
    per_row_full = 4 * lane_pad(D) * in_itemsize + 2 * lane * 4
    tm = budget // per_row_full
    if tm >= min(sublane, B):
        if tm >= B:
            return B, D                      # single row block, full extents
        tm = max(sublane, (tm // sublane) * sublane)
        return tm, D

    # Rows too wide for even `sublane` rows at full width -> column-block.
    tm = min(sublane, B)
    tn_pad = (budget - 2 * tm * lane * 4) // (4 * tm * in_itemsize)
    tn = max(lane, (tn_pad // lane) * lane)
    tn = min(tn, D)
    return tm, tn


def weighted_mse_loss(inp, tgt, weight, *, tile_rows=None, tile_cols=None):
    """inp, tgt: (B, D); weight: (B,). Returns scalar float32."""
    B, D = inp.shape
    assert tgt.shape == (B, D) and weight.shape == (B,)

    w2d = weight.reshape(B, 1)
    in_itemsize = jnp.dtype(inp.dtype).itemsize
    sublane = max(8, 32 // in_itemsize)      # 8 f32, 16 bf16, 32 int8/fp8

    # Per-generation VMEM budget (v5e/v6e: 128 MiB, v7x: 64 MiB).
    try:
        vmem_cap = int(pltpu.get_tpu_info().vmem_capacity_bytes)
    except Exception:
        vmem_cap = 64 * 1024 * 1024          # conservative (v7x-sized) default
    budget = (vmem_cap * 3) // 8             # ~24 MiB on v7x, ~48 MiB on v6e/v5e
    vmem_limit = (vmem_cap * 3) // 4         # ~48 MiB on v7x, ~96 MiB on v6e/v5e

    tm, tn = _choose_tiles(B, D, in_itemsize, budget, sublane)
    if tile_rows is not None:
        tm = min(tile_rows, B)
        if tm < B:
            tm = max(sublane, (tm // sublane) * sublane)
    if tile_cols is not None:
        tn = min(tile_cols, D)
        if tn < D:
            tn = max(128, (tn // 128) * 128)

    nb_rows = pl.cdiv(B, tm)
    nb_cols = pl.cdiv(D, tn)
    need_row_mask = (B % tm) != 0
    need_col_mask = (D % tn) != 0

    kernel = functools.partial(
        _weighted_mse_kernel,
        total_rows=B, total_cols=D, tile_rows=tm, tile_cols=tn,
        need_row_mask=need_row_mask, need_col_mask=need_col_mask)

    bytes_accessed = (2 * B * D) * in_itemsize \
        + B * jnp.dtype(weight.dtype).itemsize + nb_rows * 8 * 128 * 4
    cost = pl.CostEstimate(flops=4 * B * D, transcendentals=0,
                           bytes_accessed=int(bytes_accessed))

    partials = pl.pallas_call(
        kernel,
        out_shape=jax.ShapeDtypeStruct((nb_rows, 8, 128), jnp.float32),
        grid_spec=pltpu.PrefetchScalarGridSpec(
            num_scalar_prefetch=0,
            grid=(nb_rows, nb_cols),
            in_specs=[
                pl.BlockSpec((tm, tn), lambda i, j: (i, j)),
                pl.BlockSpec((tm, tn), lambda i, j: (i, j)),
                pl.BlockSpec((tm, 1), lambda i, j: (i, 0)),
            ],
            out_specs=pl.BlockSpec((1, 8, 128), lambda i, j: (i, 0, 0)),
            scratch_shapes=[pltpu.SMEM((1, 1), jnp.float32)],
        ),
        compiler_params=pltpu.CompilerParams(
            dimension_semantics=("parallel", "arbitrary"),
            vmem_limit_bytes=int(vmem_limit),
        ),
        cost_estimate=cost,
    )(inp, tgt, w2d)

    inv_bd = 1.0 / float(B * D)
    # Single combined scale: (1/D from mean(dim=1)) * (1/B from .mean()).
    return jnp.sum(partials[:, 0, 0]) * jnp.float32(inv_bd)


def _reference(inp, tgt, weight):
    return jnp.mean(jnp.mean((inp - tgt) ** 2, axis=1) * weight)


if __name__ == "__main__":
    key = jax.random.PRNGKey(0)

    # --- 1) Small demo consistent with the module (batch of samples,
    #        per-sample attribute-score vectors, per-sample weight). ---
    k1, k2, k3 = jax.random.split(key, 3)
    B, D = 8, 16
    inp = jax.random.normal(k1, (B, D), dtype=jnp.float32)
    tgt = jax.random.normal(k2, (B, D), dtype=jnp.float32)
    weight = jax.random.uniform(k3, (B,), dtype=jnp.float32)

    loss = jax.block_until_ready(weighted_mse_loss(inp, tgt, weight))
    ref = _reference(inp, tgt, weight)
    assert jnp.allclose(loss, ref, rtol=1e-5, atol=1e-6), (loss, ref)

    # --- 2) Multi row-block grid + ragged-row mask + per-block partials. ---
    k4, k5, k6 = jax.random.split(jax.random.PRNGKey(0), 3)
    B2, D2 = 200, 16
    inp2 = jax.random.normal(k4, (B2, D2), dtype=jnp.float32)
    tgt2 = jax.random.normal(k5, (B2, D2), dtype=jnp.float32)
    weight2 = jax.random.uniform(k6, (B2,), dtype=jnp.float32)

    loss2 = jax.block_until_ready(
        weighted_mse_loss(inp2, tgt2, weight2, tile_rows=64))
    ref2 = _reference(inp2, tgt2, weight2)
    assert jnp.allclose(loss2, ref2, rtol=1e-5, atol=1e-6), (loss2, ref2)

    # --- 3) Column blocking (2-D grid) + ragged row AND column masks. ---
    k7, k8, k9 = jax.random.split(jax.random.PRNGKey(0), 3)
    B3, D3 = 24, 300
    inp3 = jax.random.normal(k7, (B3, D3), dtype=jnp.float32)
    tgt3 = jax.random.normal(k8, (B3, D3), dtype=jnp.float32)
    weight3 = jax.random.uniform(k9, (B3,), dtype=jnp.float32)

    loss3 = jax.block_until_ready(
        weighted_mse_loss(inp3, tgt3, weight3, tile_rows=16, tile_cols=128))
    ref3 = _reference(inp3, tgt3, weight3)
    assert jnp.allclose(loss3, ref3, rtol=1e-5, atol=1e-6), (loss3, ref3)

    print("KERNEL_OK")
</pallas_src>

<mosaic_0001>
module attributes {stable_mosaic.version = 11 : i64} {
  func.func @_weighted_mse_kernel(%arg0: i32, %arg1: i32, %arg2: memref<8x16xf32, #tpu.memory_space<vmem>>, %arg3: memref<8x16xf32, #tpu.memory_space<vmem>>, %arg4: memref<8x1xf32, #tpu.memory_space<vmem>>, %arg5: memref<1x8x128xf32, #tpu.memory_space<vmem>>, %arg6: memref<1x1xf32, #tpu.memory_space<smem>>) attributes {dimension_semantics = [#tpu.dimension_semantics<parallel>, #tpu.dimension_semantics<arbitrary>], iteration_bounds = array<i64: 1, 1>, scalar_prefetch = 0 : i64, scratch_operands = 1 : i64, tpu.core_type = #tpu.core_type<tc>, window_params = [{transform_indices = @transform_0, window_bounds = array<i64: 8, 16>}, {transform_indices = @transform_1, window_bounds = array<i64: 8, 16>}, {transform_indices = @transform_2, window_bounds = array<i64: 8, 1>}, {transform_indices = @transform_3, window_bounds = array<i64: 1, 8, 128>}]} {
    %c0_i32 = arith.constant 0 : i32
    %0 = arith.cmpi eq, %arg1, %c0_i32 : i32
    %1 = arith.extui %0 : i1 to i32
    %c0_i32_0 = arith.constant 0 : i32
    %2 = arith.cmpi ne, %1, %c0_i32_0 : i32
    scf.if %2 {
      %cst_12 = arith.constant 0.000000e+00 : f32
      %c0_13 = arith.constant 0 : index
      %c0_14 = arith.constant 0 : index
      %20 = memref.load %arg6[%c0_13, %c0_14] : memref<1x1xf32, #tpu.memory_space<smem>>
      memref.store %cst_12, %arg6[%c0_13, %c0_14] : memref<1x1xf32, #tpu.memory_space<smem>>
    } else {
    }
    %c0 = arith.constant 0 : index
    %c0_1 = arith.constant 0 : index
    %3 = vector.load %arg2[%c0, %c0_1] : memref<8x16xf32, #tpu.memory_space<vmem>>, vector<8x16xf32>
    %c0_2 = arith.constant 0 : index
    %c0_3 = arith.constant 0 : index
    %4 = vector.load %arg3[%c0_2, %c0_3] : memref<8x16xf32, #tpu.memory_space<vmem>>, vector<8x16xf32>
    %5 = arith.subf %3, %4 : vector<8x16xf32>
    %c0_4 = arith.constant 0 : index
    %c0_5 = arith.constant 0 : index
    %6 = vector.load %arg4[%c0_4, %c0_5] : memref<8x1xf32, #tpu.memory_space<vmem>>, vector<8x1xf32>
    %7 = arith.mulf %5, %5 : vector<8x16xf32>
    %8 = vector.broadcast %6 : vector<8x1xf32> to vector<8x16xf32>
    %9 = arith.mulf %7, %8 : vector<8x16xf32>
    %c0_6 = arith.constant 0 : index
    %c0_7 = arith.constant 0 : index
    %10 = memref.load %arg6[%c0_6, %c0_7] : memref<1x1xf32, #tpu.memory_space<smem>>
    %11 = vector.shape_cast %9 : vector<8x16xf32> to vector<1x8x16xf32>
    %cst = arith.constant dense<0.000000e+00> : vector<1xf32>
    %12 = vector.multi_reduction <add>, %11, %cst [1, 2] : vector<1x8x16xf32> to vector<1xf32>
    %13 = vector.shape_cast %12 : vector<1xf32> to vector<1x1x1xf32>
    %14 = vector.extract %13[0, 0, 0] : f32 from vector<1x1x1xf32>
    %15 = arith.addf %10, %14 : f32
    %c0_8 = arith.constant 0 : index
    %c0_9 = arith.constant 0 : index
    %16 = memref.load %arg6[%c0_8, %c0_9] : memref<1x1xf32, #tpu.memory_space<smem>>
    memref.store %15, %arg6[%c0_8, %c0_9] : memref<1x1xf32, #tpu.memory_space<smem>>
    %c0_i32_10 = arith.constant 0 : i32
    %17 = arith.cmpi eq, %arg1, %c0_i32_10 : i32
    %18 = arith.extui %17 : i1 to i32
    %c0_i32_11 = arith.constant 0 : i32
    %19 = arith.cmpi ne, %18, %c0_i32_11 : i32
    scf.if %19 {
      %c0_12 = arith.constant 0 : index
      %c0_13 = arith.constant 0 : index
      %20 = memref.load %arg6[%c0_12, %c0_13] : memref<1x1xf32, #tpu.memory_space<smem>>
      %21 = vector.broadcast %20 : f32 to vector<1x8x128xf32>
      %c0_14 = arith.constant 0 : index
      %c0_15 = arith.constant 0 : index
      %c0_16 = arith.constant 0 : index
      %22 = vector.load %arg5[%c0_14, %c0_15, %c0_16] : memref<1x8x128xf32, #tpu.memory_space<vmem>>, vector<1x8x128xf32>
      tpu.vector_store %arg5[%c0_14, %c0_15, %c0_16], %21 {strides = array<i32>} : memref<1x8x128xf32, #tpu.memory_space<vmem>>, vector<1x8x128xf32>,
    } else {
    }
    return
  }
  func.func @transform_0(%arg0: i32, %arg1: i32) -> (i32, i32) {
    %c0_i32 = arith.constant 0 : i32
    return %arg0, %arg1 : i32, i32
  }
  func.func @transform_1(%arg0: i32, %arg1: i32) -> (i32, i32) {
    %c0_i32 = arith.constant 0 : i32
    return %arg0, %arg1 : i32, i32
  }
  func.func @transform_2(%arg0: i32, %arg1: i32) -> (i32, i32) {
    %c0_i32 = arith.constant 0 : i32
    %c0_i32_0 = arith.constant 0 : i32
    return %arg0, %c0_i32 : i32, i32
  }
  func.func @transform_3(%arg0: i32, %arg1: i32) -> (i32, i32, i32) {
    %c0_i32 = arith.constant 0 : i32
    %c0_i32_0 = arith.constant 0 : i32
    %c0_i32_1 = arith.constant 0 : i32
    return %arg0, %c0_i32, %c0_i32_0 : i32, i32, i32
  }
}

</mosaic_0001>

<llo_original>
// kernel: tpu_custom_call.1
$region0: #{tpu_custom_call.1}
  #allocation0 [shape = 'u32[]', space=smem, size = 0x4, offset = 0x4, fixed_abs, tag = 'smem constant byte address 0x4 - core index']
  #allocation1 [shape = 'u32[144,128]{1,0:T(1,128)}', space=vmem, size = 0x12000, scoped, tag = 'internal scratch']
  #allocation2 [shape = 'f32[1,1]{1,0:T(1,128)}', space=smem, size = 0x200, scoped, tag = 'scratch operand']
  %s0 = inlined_call_operand.vmem [shape: f32[8,16], index: 0, kind: input, shape index: {}]
  %s1 = inlined_call_operand.hbm [shape: f32[8,16], index: 1, kind: input, shape index: {}]
  %s2 = inlined_call_operand.vmem [shape: f32[8,1], index: 2, kind: input, shape index: {}]
  %s3 = inlined_call_operand.hbm [shape: f32[1,8,128], index: 3, kind: output, shape index: {}]
  %s4 = sld [smem:[#allocation0]]
  $region34: #{tpu_custom_call.1} parent=0
    _
  %s6 = ssub.s32 1, %s4
  %s7 = scalar_select 0, %s6, %s4
  $region1: #{tpu_custom_call.1} parent=0
    #allocation3 [shape = 'u8[4096]{0}', space=vmem, size = 0x1000, scoped, tag = 'input window, operand 1, single buffered']
    #allocation4 [shape = 's32[1]{0}', space=sflag, size = 0x4, scoped, tag = 'scoped memory for tpu_custom_call.1']
    #allocation5 [shape = 's32[1]{0}', space=sflag, size = 0x4, scoped, tag = 'scoped memory for tpu_custom_call.1']
    #allocation6 [shape = 'u8[4096]{0}', space=vmem, size = 0x1000, scoped, tag = 'output window, operand 0, single buffered']
    %8 = vsyncpa [#allocation4], 0
    %9 = vsyncpa [#allocation5], 0
    // Predicated region
    $region2: #{tpu_custom_call.1} parent=1 // pred_check
      _
    $region3: #{tpu_custom_call.1} parent=1 // pred_check_branch
      %11 = sbr.rel (0) target = $region5
    $region4: #{tpu_custom_call.1} parent=1 // pred_region
      _
    $region5: #{tpu_custom_call.1} parent=1 // pred_fallthru
      _
    // Predicated region
    $region6: #{tpu_custom_call.1} parent=1 // pred_check
      _
    $region7: #{tpu_custom_call.1} parent=1 // pred_check_branch
      %13 = sbr.rel (0) target = $region9
    $region8: #{tpu_custom_call.1} parent=1 // pred_region
      %s15 = ssub.s32 128, 128
      %16 = vsyncadd [#allocation4], %s15
      %s18 = sshll.u32 [#allocation3], 4
      %s19 = int_to_ptr.vmem [resolvable:$true] %s18
      %21 = dma.hbm_to_vmem [thread:$0]  %s1, 128, %s19, [#allocation4]
    $region9: #{tpu_custom_call.1} parent=1 // pred_fallthru
      _
    // Predicated region
    $region10: #{tpu_custom_call.1} parent=1 // pred_check
      _
    $region11: #{tpu_custom_call.1} parent=1 // pred_check_branch
      %23 = sbr.rel (0) target = $region13
    $region12: #{tpu_custom_call.1} parent=1 // pred_region
      _
    $region13: #{tpu_custom_call.1} parent=1 // pred_fallthru
      _
    // Predicated region
    $region14: #{tpu_custom_call.1} parent=1 // pred_check
      _
    $region15: #{tpu_custom_call.1} parent=1 // pred_check_branch
      %25 = sbr.rel (0) target = $region17
    $region16: #{tpu_custom_call.1} parent=1 // pred_region
      %26 = dma.done [#allocation4], 128
    $region17: #{tpu_custom_call.1} parent=1 // pred_fallthru
      _
    %p27 = scmp.eq.s32.totalorder 0, 0
    // Predicated region
    $region18: #{tpu_custom_call.1} parent=1 // pred_check
      %p28 = pneg %p27
    $region19: #{tpu_custom_call.1} parent=1 // pred_check_branch
      %30 = sbr.rel (%p28) target = $region21
    $region20: #{tpu_custom_call.1} parent=1 // pred_region
      %s31 = scalar_lea.smem [#allocation2], 0
      %32 = sst [smem:[%s31]] 0.0
    $region21: #{tpu_custom_call.1} parent=1 // pred_fallthru
      _
    %v33 = vld [vmem:[%s0] sm:$0xff]
    %v34 = vld [vmem:[#allocation3] sm:$0xff]
    %v35 = vsub.f32 %v33, %v34
    %v36 = vld [vmem:[%s2] sm:$0xff]
    %v37 = vmul.f32 %v35, %v35
    %39 = vset.pattern.permute.xlu0 0
    %40 = vperm.xlu0 %39, %v36
    %v41 = vpop.permute.xlu0 %40
    %v43 = vmul.f32 %v37, %v41
    %s44 = sld [smem:[#allocation2]]
    %vm45 = vcmask 130048
    %v46 = vsel %vm45, %v43, 0.0
    %47 = vadd.xlane.f32.xlu0 %v46
    %v48 = vpop.xlane.xlu0 %47
    %v49 = vrot.slane %v48, 4
    %v50 = vadd.f32 %v48, %v49
    %v51 = vrot.slane %v50, 2
    %v52 = vadd.f32 %v50, %v51
    %v53 = vrot.slane %v52, 1
    %v54 = vadd.f32 %v52, %v53
    %s55 = vtos %v54
    %s56 = sadd.f32 %s44, %s55
    %s57 = scalar_lea.smem [#allocation2], 0
    %58 = sst [smem:[%s57]] %s56
    // Predicated region
    $region22: #{tpu_custom_call.1} parent=1 // pred_check
      %p59 = pneg %p27
    $region23: #{tpu_custom_call.1} parent=1 // pred_check_branch
      %61 = sbr.rel (%p59) target = $region25
    $region24: #{tpu_custom_call.1} parent=1 // pred_region
      %s62 = sld [smem:[#allocation2]]
      %v63 = vstv %s62
      %64 = vst [vmem:[#allocation6] sm:$0xff] %v63
    $region25: #{tpu_custom_call.1} parent=1 // pred_fallthru
      _
    // Predicated region
    $region26: #{tpu_custom_call.1} parent=1 // pred_check
      _
    $region27: #{tpu_custom_call.1} parent=1 // pred_check_branch
      %66 = sbr.rel (0) target = $region29
    $region28: #{tpu_custom_call.1} parent=1 // pred_region
      %s68 = ssub.s32 128, 128
      %69 = vsyncadd [#allocation5], %s68
      %s71 = sshll.u32 [#allocation6], 4
      %s72 = int_to_ptr.vmem [resolvable:$true] %s71
      %74 = dma.vmem_to_hbm [thread:$0]  %s72, 128, %s3, [#allocation5]
    $region29: #{tpu_custom_call.1} parent=1 // pred_fallthru
      _
    // Predicated region
    $region30: #{tpu_custom_call.1} parent=1 // pred_check
      _
    $region31: #{tpu_custom_call.1} parent=1 // pred_check_branch
      %76 = sbr.rel (0) target = $region33
    $region32: #{tpu_custom_call.1} parent=1 // pred_region
      %77 = dma.done [#allocation5], 128
    $region33: #{tpu_custom_call.1} parent=1 // pred_fallthru
      _
    %78 = vsyncpa [#allocation4], 1
    %79 = vsyncpa [#allocation5], 1

</llo_original>
